<compile_context>
chip_gen: v7x
topology: tpu7x:2x2x1
jax: 0.10.0
libtpu: 0.0.40
codegen_flags: <defaults>
</compile_context>

<pallas_src>
import jax
import jax.numpy as jnp
import numpy as np
from jax.experimental import pallas as pl
from jax.experimental.pallas import tpu as pltpu


# ------------------------------ shared helpers -------------------------------

def _prelu(x, alpha):
    # nn.PReLU with a single shared parameter (alpha is a scalar).
    return jnp.where(x >= 0, x, alpha * x)


def _log_exp_plus(x, log_min):
    # log(exp(x) + exp(log_min)), numerically stable (shifted logaddexp).
    m = jnp.maximum(x, log_min)
    return m + jnp.log(jnp.exp(x - m) + jnp.exp(log_min - m))


# --------------------------------- kernel ------------------------------------

def make_ff_vae_rotation_kernel(n_enc, n_dec, latent_dim, out_dim,
                                min_lv_log_enc, min_lv_log_dec):
    """Fused forward kernel. All activations are feature-major: (feat, TN)."""

    def kernel(*refs):
        it = iter(refs)
        x_ref = next(it)                                   # (in_dim, TN)
        eps_ref = next(it)                                 # (L, TN)
        wrot_ref = next(it)                                # (in_dim, in_dim)
        enc_layers = [(next(it), next(it)) for _ in range(n_enc)]  # (out,in),(out,1)
        enc_hw_ref, enc_hb_ref = next(it), next(it)        # (2L, H), (2L, 1)
        dec_layers = [(next(it), next(it)) for _ in range(n_dec)]
        dec_hw_ref, dec_hb_ref = next(it), next(it)        # (2D, H), (2D, 1)
        alpha_ref = next(it)                               # SMEM (1,)
        out_ref = next(it)                                 # (2L+2D, TN)

        alpha = alpha_ref[0]                               # scalar, hoisted once

        # rotation: (x @ W_rot^T)^T  ==  W_rot @ x^T
        h = jnp.dot(wrot_ref[...], x_ref[...], preferred_element_type=jnp.float32)

        # encoder hidden stack (Linear + shared PReLU), feature-major
        for w_ref, b_ref in enc_layers:
            h = _prelu(
                jnp.dot(w_ref[...], h, preferred_element_type=jnp.float32)
                + b_ref[...], alpha)

        # fused mean/logvar head: one MXU push, rows [0:L)=mu, [L:2L)=logvar raw
        head = (jnp.dot(enc_hw_ref[...], h, preferred_element_type=jnp.float32)
                + enc_hb_ref[...])
        lv = _log_exp_plus(head, min_lv_log_enc)           # EUP work on full slab
        ridx = jax.lax.broadcasted_iota(jnp.int32, head.shape, 0)
        enc_slab = jnp.where(ridx < latent_dim, head, lv)  # [mu_z ; logvar_z]
        out_ref[0:2 * latent_dim, :] = enc_slab

        # reparameterize (eps supplied by wrapper)
        # TODO(synk): optionally generate eps in-kernel with pltpu.prng_seed +
        # pltpu.stateful_normal to drop the HBM eps stream (kept external here
        # for deterministic testability).
        z = (enc_slab[:latent_dim, :]
             + eps_ref[...] * jnp.exp(0.5 * enc_slab[latent_dim:, :]))

        # decoder hidden stack
        h = z
        for w_ref, b_ref in dec_layers:
            h = _prelu(
                jnp.dot(w_ref[...], h, preferred_element_type=jnp.float32)
                + b_ref[...], alpha)

        head = (jnp.dot(dec_hw_ref[...], h, preferred_element_type=jnp.float32)
                + dec_hb_ref[...])
        lv = _log_exp_plus(head, min_lv_log_dec)
        ridx = jax.lax.broadcasted_iota(jnp.int32, head.shape, 0)
        dec_slab = jnp.where(ridx < out_dim, head, lv)     # [mu_x ; logvar_x]
        out_ref[2 * latent_dim:2 * latent_dim + 2 * out_dim, :] = dec_slab

    return kernel


# --------------------------------- wrapper ------------------------------------

def ff_vae_rotation_forward(params, x, eps, *, block_rows=2048):
    """x: (N, in_dim) f32 (concatenated frames), eps: (N, latent) f32."""
    N, in_dim = x.shape
    L = params["enc_head_w"].shape[0] // 2
    D = params["dec_head_w"].shape[0] // 2
    n_enc = len(params["enc_layers"])
    n_dec = len(params["dec_layers"])

    # Feature-major presentation: frames on the 128-lane axis.
    x_t = x.T                      # (in_dim, N)
    eps_t = eps.T                  # (L, N)

    # Lane tile: multiple of 128; cap so large N gets >=2 grid steps (v7x
    # megacore with "parallel" semantics).  Tiny N: single full-extent block.
    block_rows = max(128, (int(block_rows) // 128) * 128)
    if N <= 256:
        tn = N
    else:
        tn = min(block_rows, ((pl.cdiv(N, 2) + 127) // 128) * 128)
    grid = (pl.cdiv(N, tn),)

    def row_spec(d):
        return pl.BlockSpec((d, tn), lambda i: (0, i))

    def full_spec(a):
        nd = a.ndim
        return pl.BlockSpec(a.shape, lambda i, _nd=nd: (0,) * _nd)

    inputs = [x_t, eps_t, params["w_rot"]]
    in_specs = [row_spec(in_dim), row_spec(L), full_spec(params["w_rot"])]
    for w, b in params["enc_layers"]:
        inputs += [w, b]
        in_specs += [full_spec(w), full_spec(b)]
    inputs += [params["enc_head_w"], params["enc_head_b"]]
    in_specs += [full_spec(params["enc_head_w"]), full_spec(params["enc_head_b"])]
    for w, b in params["dec_layers"]:
        inputs += [w, b]
        in_specs += [full_spec(w), full_spec(b)]
    inputs += [params["dec_head_w"], params["dec_head_b"], params["alpha"]]
    in_specs += [full_spec(params["dec_head_w"]), full_spec(params["dec_head_b"]),
                 pl.BlockSpec(memory_space=pltpu.MemorySpace.SMEM)]

    kernel = make_ff_vae_rotation_kernel(
        n_enc, n_dec, L, D,
        params["min_lv_log_enc"], params["min_lv_log_dec"])

    out = pl.pallas_call(
        kernel,
        out_shape=jax.ShapeDtypeStruct((2 * L + 2 * D, N), jnp.float32),
        grid_spec=pltpu.PrefetchScalarGridSpec(
            num_scalar_prefetch=0,
            grid=grid,
            in_specs=in_specs,
            out_specs=row_spec(2 * L + 2 * D),
        ),
        compiler_params=pltpu.CompilerParams(
            dimension_semantics=("parallel",)),   # both TCs on v7x when grid >= 2
    )(*inputs)

    out_t = out.T                                  # (N, 2L+2D), single transpose
    mu_z = out_t[:, 0:L]
    logvar_z = out_t[:, L:2 * L]
    mu_x = out_t[:, 2 * L:2 * L + D]
    logvar_x = out_t[:, 2 * L + D:2 * L + 2 * D]
    return mu_z, logvar_z, mu_x, logvar_x


# ------------------------- deterministic parameter init ----------------------

def init_params(key, in_dim, enc_hid, latent_dim, dec_hid, out_dim,
                min_lv_log_enc=-6.0, min_lv_log_dec=-6.0):
    # Weights are stored in PyTorch orientation (out, in); biases as (out, 1).
    def linear(k, fan_in, fan_out):
        k1, k2 = jax.random.split(k)
        bound = 1.0 / np.sqrt(fan_in)
        w = jax.random.uniform(k1, (fan_out, fan_in), jnp.float32, -bound, bound)
        b = jax.random.uniform(k2, (fan_out, 1), jnp.float32, -bound, bound)
        return w, b

    params = {"min_lv_log_enc": float(min_lv_log_enc),
              "min_lv_log_dec": float(min_lv_log_dec)}

    # rotation Linear(in_dim, in_dim, bias=False), identity init
    params["w_rot"] = jnp.eye(in_dim, dtype=jnp.float32)

    # encoder hidden stack
    params["enc_layers"] = []
    prev = in_dim
    for h in enc_hid:
        key, k = jax.random.split(key)
        params["enc_layers"].append(linear(k, prev, h))
        prev = h
    # encoder heads fc_m / fc_lv merged row-wise into one (2L, H) weight
    key, km, kv = jax.random.split(key, 3)
    wm, bm = linear(km, prev, latent_dim)
    wv, bv = linear(kv, prev, latent_dim)
    params["enc_head_w"] = jnp.concatenate([wm, wv], axis=0)
    params["enc_head_b"] = jnp.concatenate([bm, bv], axis=0)

    # decoder hidden stack
    params["dec_layers"] = []
    prev = latent_dim
    for h in dec_hid:
        key, k = jax.random.split(key)
        params["dec_layers"].append(linear(k, prev, h))
        prev = h
    key, km, kv = jax.random.split(key, 3)
    wm, bm = linear(km, prev, out_dim)
    wv, bv = linear(kv, prev, out_dim)
    params["dec_head_w"] = jnp.concatenate([wm, wv], axis=0)
    params["dec_head_b"] = jnp.concatenate([bm, bv], axis=0)

    # single shared nn.PReLU parameter (encoder and decoder share act_fun)
    params["alpha"] = jnp.full((1,), 0.25, jnp.float32)
    return params


# ------------------------------ pure-JAX reference ---------------------------

def ff_vae_rotation_ref(params, x, eps):
    alpha = params["alpha"][0]
    L = params["enc_head_w"].shape[0] // 2
    D = params["dec_head_w"].shape[0] // 2

    h = x @ params["w_rot"].T
    for w, b in params["enc_layers"]:
        h = _prelu(h @ w.T + b.T, alpha)
    head = h @ params["enc_head_w"].T + params["enc_head_b"].T
    mu_z = head[:, :L]
    logvar_z = _log_exp_plus(head[:, L:], params["min_lv_log_enc"])

    z = mu_z + eps * jnp.exp(0.5 * logvar_z)

    h = z
    for w, b in params["dec_layers"]:
        h = _prelu(h @ w.T + b.T, alpha)
    head = h @ params["dec_head_w"].T + params["dec_head_b"].T
    mu_x = head[:, :D]
    logvar_x = _log_exp_plus(head[:, D:], params["min_lv_log_dec"])
    return mu_z, logvar_z, mu_x, logvar_x


# ------------------------------------ main ------------------------------------

if __name__ == "__main__":
    # conf: enc.in_dim=16, enc.hid_dim=[32,32], enc.out_dim_m=8 (= dec.in_dim),
    #       dec.hid_dim=[32,32], dec.out_dim_m=16, out_dim_lv == out_dim_m.
    in_dim, latent_dim = 16, 8
    enc_hid, dec_hid = [32, 32], [32, 32]

    key = jax.random.PRNGKey(0)
    key, kp = jax.random.split(key)
    params = init_params(kp, in_dim, enc_hid, latent_dim, dec_hid, in_dim)

    # TODO(synk): FIX_LV / SHARED_COV / out_dim_lv==1 config branches and the
    # training-time losses (KLD, rec, rotation MSE) are not part of this
    # forward-pass kernel; default inference config only.
    names = ["mu_z", "logvar_z", "mu_x", "logvar_x"]
    for N in (16, 1024):   # tiny single-block case + multi-step "parallel" grid
        key, kx, ke = jax.random.split(key, 3)
        x = jax.random.normal(kx, (N, in_dim), jnp.float32)
        # eps for reparameterize() is generated in the wrapper and passed in
        # (stochastic semantics preserved, deterministic for the test).
        eps = jax.random.normal(ke, (N, latent_dim), jnp.float32)

        out = ff_vae_rotation_forward(params, x, eps)
        jax.block_until_ready(out)

        ref = ff_vae_rotation_ref(params, x, eps)
        for a, b, name in zip(out, ref, names):
            np.testing.assert_allclose(np.asarray(a), np.asarray(b),
                                       rtol=1e-4, atol=1e-5,
                                       err_msg=f"{name} (N={N})")
        assert out[0].shape == (N, latent_dim) and out[1].shape == (N, latent_dim)
        assert out[2].shape == (N, in_dim) and out[3].shape == (N, in_dim)

    print("KERNEL_OK")
</pallas_src>

<mosaic_0001>
module attributes {stable_mosaic.version = 11 : i64} {
  func.func @kernel(%arg0: i32, %arg1: memref<16x16xf32, #tpu.memory_space<vmem>>, %arg2: memref<8x16xf32, #tpu.memory_space<vmem>>, %arg3: memref<16x16xf32, #tpu.memory_space<vmem>>, %arg4: memref<32x16xf32, #tpu.memory_space<vmem>>, %arg5: memref<32x1xf32, #tpu.memory_space<vmem>>, %arg6: memref<32x32xf32, #tpu.memory_space<vmem>>, %arg7: memref<32x1xf32, #tpu.memory_space<vmem>>, %arg8: memref<16x32xf32, #tpu.memory_space<vmem>>, %arg9: memref<16x1xf32, #tpu.memory_space<vmem>>, %arg10: memref<32x8xf32, #tpu.memory_space<vmem>>, %arg11: memref<32x1xf32, #tpu.memory_space<vmem>>, %arg12: memref<32x32xf32, #tpu.memory_space<vmem>>, %arg13: memref<32x1xf32, #tpu.memory_space<vmem>>, %arg14: memref<32x32xf32, #tpu.memory_space<vmem>>, %arg15: memref<32x1xf32, #tpu.memory_space<vmem>>, %arg16: memref<1xf32, #tpu.memory_space<smem>>, %arg17: memref<48x16xf32, #tpu.memory_space<vmem>>) attributes {dimension_semantics = [#tpu.dimension_semantics<parallel>], iteration_bounds = array<i64: 1>, scalar_prefetch = 0 : i64, scratch_operands = 0 : i64, tpu.core_type = #tpu.core_type<tc>, window_params = [{transform_indices = @transform_0, window_bounds = array<i64: 16, 16>}, {transform_indices = @transform_1, window_bounds = array<i64: 8, 16>}, {pipeline_mode = #tpu.pipeline_mode<synchronous>, transform_indices = @transform_2, window_bounds = array<i64: 16, 16>}, {pipeline_mode = #tpu.pipeline_mode<synchronous>, transform_indices = @transform_3, window_bounds = array<i64: 32, 16>}, {pipeline_mode = #tpu.pipeline_mode<synchronous>, transform_indices = @transform_4, window_bounds = array<i64: 32, 1>}, {pipeline_mode = #tpu.pipeline_mode<synchronous>, transform_indices = @transform_5, window_bounds = array<i64: 32, 32>}, {pipeline_mode = #tpu.pipeline_mode<synchronous>, transform_indices = @transform_6, window_bounds = array<i64: 32, 1>}, {pipeline_mode = #tpu.pipeline_mode<synchronous>, transform_indices = @transform_7, window_bounds = array<i64: 16, 32>}, {pipeline_mode = #tpu.pipeline_mode<synchronous>, transform_indices = @transform_8, window_bounds = array<i64: 16, 1>}, {pipeline_mode = #tpu.pipeline_mode<synchronous>, transform_indices = @transform_9, window_bounds = array<i64: 32, 8>}, {pipeline_mode = #tpu.pipeline_mode<synchronous>, transform_indices = @transform_10, window_bounds = array<i64: 32, 1>}, {pipeline_mode = #tpu.pipeline_mode<synchronous>, transform_indices = @transform_11, window_bounds = array<i64: 32, 32>}, {pipeline_mode = #tpu.pipeline_mode<synchronous>, transform_indices = @transform_12, window_bounds = array<i64: 32, 1>}, {pipeline_mode = #tpu.pipeline_mode<synchronous>, transform_indices = @transform_13, window_bounds = array<i64: 32, 32>}, {pipeline_mode = #tpu.pipeline_mode<synchronous>, transform_indices = @transform_14, window_bounds = array<i64: 32, 1>}, {transform_indices = @transform_15, window_bounds = array<i64: 1>}, {transform_indices = @transform_16, window_bounds = array<i64: 48, 16>}]} {
    %c0 = arith.constant 0 : index
    %0 = memref.load %arg16[%c0] : memref<1xf32, #tpu.memory_space<smem>>
    %c0_0 = arith.constant 0 : index
    %c0_1 = arith.constant 0 : index
    %1 = vector.load %arg3[%c0_0, %c0_1] : memref<16x16xf32, #tpu.memory_space<vmem>>, vector<16x16xf32>
    %c0_2 = arith.constant 0 : index
    %c0_3 = arith.constant 0 : index
    %2 = vector.load %arg1[%c0_2, %c0_3] : memref<16x16xf32, #tpu.memory_space<vmem>>, vector<16x16xf32>
    %cst = arith.constant dense<0.000000e+00> : vector<16x16xf32>
    %3 = tpu.matmul %1, %2, %cst {dimension_numbers = #tpu.dot_dimension_numbers<[1], [0], [0], [1], [0, 0, 1, 1], [], []>} : vector<16x16xf32>, vector<16x16xf32>, vector<16x16xf32> -> vector<16x16xf32>
    %c0_4 = arith.constant 0 : index
    %c0_5 = arith.constant 0 : index
    %4 = vector.load %arg4[%c0_4, %c0_5] : memref<32x16xf32, #tpu.memory_space<vmem>>, vector<32x16xf32>
    %cst_6 = arith.constant dense<0.000000e+00> : vector<32x16xf32>
    %5 = tpu.matmul %4, %3, %cst_6 {dimension_numbers = #tpu.dot_dimension_numbers<[1], [0], [0], [1], [0, 0, 1, 1], [], []>} : vector<32x16xf32>, vector<16x16xf32>, vector<32x16xf32> -> vector<32x16xf32>
    %c0_7 = arith.constant 0 : index
    %c0_8 = arith.constant 0 : index
    %6 = vector.load %arg5[%c0_7, %c0_8] : memref<32x1xf32, #tpu.memory_space<vmem>>, vector<32x1xf32>
    %7 = vector.broadcast %6 : vector<32x1xf32> to vector<32x16xf32>
    %8 = arith.addf %5, %7 : vector<32x16xf32>
    %cst_9 = arith.constant 0.000000e+00 : f32
    %9 = vector.broadcast %cst_9 : f32 to vector<32x16xf32>
    %10 = arith.cmpf oge, %8, %9 : vector<32x16xf32>
    %11 = vector.broadcast %0 : f32 to vector<32x16xf32>
    %12 = arith.mulf %11, %8 : vector<32x16xf32>
    %13 = arith.select %10, %8, %12 : vector<32x16xi1>, vector<32x16xf32>
    %c0_10 = arith.constant 0 : index
    %c0_11 = arith.constant 0 : index
    %14 = vector.load %arg6[%c0_10, %c0_11] : memref<32x32xf32, #tpu.memory_space<vmem>>, vector<32x32xf32>
    %cst_12 = arith.constant dense<0.000000e+00> : vector<32x16xf32>
    %15 = tpu.matmul %14, %13, %cst_12 {dimension_numbers = #tpu.dot_dimension_numbers<[1], [0], [0], [1], [0, 0, 1, 1], [], []>} : vector<32x32xf32>, vector<32x16xf32>, vector<32x16xf32> -> vector<32x16xf32>
    %c0_13 = arith.constant 0 : index
    %c0_14 = arith.constant 0 : index
    %16 = vector.load %arg7[%c0_13, %c0_14] : memref<32x1xf32, #tpu.memory_space<vmem>>, vector<32x1xf32>
    %17 = vector.broadcast %16 : vector<32x1xf32> to vector<32x16xf32>
    %18 = arith.addf %15, %17 : vector<32x16xf32>
    %cst_15 = arith.constant 0.000000e+00 : f32
    %19 = vector.broadcast %cst_15 : f32 to vector<32x16xf32>
    %20 = arith.cmpf oge, %18, %19 : vector<32x16xf32>
    %21 = vector.broadcast %0 : f32 to vector<32x16xf32>
    %22 = arith.mulf %21, %18 : vector<32x16xf32>
    %23 = arith.select %20, %18, %22 : vector<32x16xi1>, vector<32x16xf32>
    %c0_16 = arith.constant 0 : index
    %c0_17 = arith.constant 0 : index
    %24 = vector.load %arg8[%c0_16, %c0_17] : memref<16x32xf32, #tpu.memory_space<vmem>>, vector<16x32xf32>
    %cst_18 = arith.constant dense<0.000000e+00> : vector<16x16xf32>
    %25 = tpu.matmul %24, %23, %cst_18 {dimension_numbers = #tpu.dot_dimension_numbers<[1], [0], [0], [1], [0, 0, 1, 1], [], []>} : vector<16x32xf32>, vector<32x16xf32>, vector<16x16xf32> -> vector<16x16xf32>
    %c0_19 = arith.constant 0 : index
    %c0_20 = arith.constant 0 : index
    %26 = vector.load %arg9[%c0_19, %c0_20] : memref<16x1xf32, #tpu.memory_space<vmem>>, vector<16x1xf32>
    %27 = vector.broadcast %26 : vector<16x1xf32> to vector<16x16xf32>
    %28 = arith.addf %25, %27 : vector<16x16xf32>
    %cst_21 = arith.constant -6.000000e+00 : f32
    %29 = vector.broadcast %cst_21 : f32 to vector<16x16xf32>
    %30 = arith.maximumf %28, %29 : vector<16x16xf32>
    %31 = arith.subf %28, %30 : vector<16x16xf32>
    %32 = math.exp %31 : vector<16x16xf32>
    %cst_22 = arith.constant -6.000000e+00 : f32
    %33 = vector.broadcast %cst_22 : f32 to vector<16x16xf32>
    %34 = arith.subf %33, %30 : vector<16x16xf32>
    %35 = math.exp %34 : vector<16x16xf32>
    %36 = arith.addf %32, %35 : vector<16x16xf32>
    %37 = math.log %36 : vector<16x16xf32>
    %38 = arith.addf %30, %37 : vector<16x16xf32>
    %39 = tpu.iota {dimensions = array<i32: 0>} : vector<16x16xi32>
    %c8_i32 = arith.constant 8 : i32
    %40 = vector.broadcast %c8_i32 : i32 to vector<16x16xi32>
    %41 = arith.cmpi slt, %39, %40 : vector<16x16xi32>
    %42 = arith.select %41, %28, %38 : vector<16x16xi1>, vector<16x16xf32>
    %c0_23 = arith.constant 0 : index
    %c0_24 = arith.constant 0 : index
    %43 = vector.load %arg17[%c0_23, %c0_24] : memref<48x16xf32, #tpu.memory_space<vmem>>, vector<16x16xf32>
    tpu.vector_store %arg17[%c0_23, %c0_24], %42 {strides = array<i32>} : memref<48x16xf32, #tpu.memory_space<vmem>>, vector<16x16xf32>,
    %44 = vector.extract_strided_slice %42 {offsets = [0, 0], sizes = [8, 16], strides = [1, 1]} : vector<16x16xf32> to vector<8x16xf32>
    %c0_25 = arith.constant 0 : index
    %c0_26 = arith.constant 0 : index
    %45 = vector.load %arg2[%c0_25, %c0_26] : memref<8x16xf32, #tpu.memory_space<vmem>>, vector<8x16xf32>
    %46 = vector.extract_strided_slice %42 {offsets = [8, 0], sizes = [8, 16], strides = [1, 1]} : vector<16x16xf32> to vector<8x16xf32>
    %cst_27 = arith.constant 5.000000e-01 : f32
    %47 = vector.broadcast %cst_27 : f32 to vector<8x16xf32>
    %48 = arith.mulf %47, %46 : vector<8x16xf32>
    %49 = math.exp %48 : vector<8x16xf32>
    %50 = arith.mulf %45, %49 : vector<8x16xf32>
    %51 = arith.addf %44, %50 : vector<8x16xf32>
    %c0_28 = arith.constant 0 : index
    %c0_29 = arith.constant 0 : index
    %52 = vector.load %arg10[%c0_28, %c0_29] : memref<32x8xf32, #tpu.memory_space<vmem>>, vector<32x8xf32>
    %cst_30 = arith.constant dense<0.000000e+00> : vector<32x16xf32>
    %53 = tpu.matmul %52, %51, %cst_30 {dimension_numbers = #tpu.dot_dimension_numbers<[1], [0], [0], [1], [0, 0, 1, 1], [], []>} : vector<32x8xf32>, vector<8x16xf32>, vector<32x16xf32> -> vector<32x16xf32>
    %c0_31 = arith.constant 0 : index
    %c0_32 = arith.constant 0 : index
    %54 = vector.load %arg11[%c0_31, %c0_32] : memref<32x1xf32, #tpu.memory_space<vmem>>, vector<32x1xf32>
    %55 = vector.broadcast %54 : vector<32x1xf32> to vector<32x16xf32>
    %56 = arith.addf %53, %55 : vector<32x16xf32>
    %cst_33 = arith.constant 0.000000e+00 : f32
    %57 = vector.broadcast %cst_33 : f32 to vector<32x16xf32>
    %58 = arith.cmpf oge, %56, %57 : vector<32x16xf32>
    %59 = vector.broadcast %0 : f32 to vector<32x16xf32>
    %60 = arith.mulf %59, %56 : vector<32x16xf32>
    %61 = arith.select %58, %56, %60 : vector<32x16xi1>, vector<32x16xf32>
    %c0_34 = arith.constant 0 : index
    %c0_35 = arith.constant 0 : index
    %62 = vector.load %arg12[%c0_34, %c0_35] : memref<32x32xf32, #tpu.memory_space<vmem>>, vector<32x32xf32>
    %cst_36 = arith.constant dense<0.000000e+00> : vector<32x16xf32>
    %63 = tpu.matmul %62, %61, %cst_36 {dimension_numbers = #tpu.dot_dimension_numbers<[1], [0], [0], [1], [0, 0, 1, 1], [], []>} : vector<32x32xf32>, vector<32x16xf32>, vector<32x16xf32> -> vector<32x16xf32>
    %c0_37 = arith.constant 0 : index
    %c0_38 = arith.constant 0 : index
    %64 = vector.load %arg13[%c0_37, %c0_38] : memref<32x1xf32, #tpu.memory_space<vmem>>, vector<32x1xf32>
    %65 = vector.broadcast %64 : vector<32x1xf32> to vector<32x16xf32>
    %66 = arith.addf %63, %65 : vector<32x16xf32>
    %cst_39 = arith.constant 0.000000e+00 : f32
    %67 = vector.broadcast %cst_39 : f32 to vector<32x16xf32>
    %68 = arith.cmpf oge, %66, %67 : vector<32x16xf32>
    %69 = vector.broadcast %0 : f32 to vector<32x16xf32>
    %70 = arith.mulf %69, %66 : vector<32x16xf32>
    %71 = arith.select %68, %66, %70 : vector<32x16xi1>, vector<32x16xf32>
    %c0_40 = arith.constant 0 : index
    %c0_41 = arith.constant 0 : index
    %72 = vector.load %arg14[%c0_40, %c0_41] : memref<32x32xf32, #tpu.memory_space<vmem>>, vector<32x32xf32>
    %cst_42 = arith.constant dense<0.000000e+00> : vector<32x16xf32>
    %73 = tpu.matmul %72, %71, %cst_42 {dimension_numbers = #tpu.dot_dimension_numbers<[1], [0], [0], [1], [0, 0, 1, 1], [], []>} : vector<32x32xf32>, vector<32x16xf32>, vector<32x16xf32> -> vector<32x16xf32>
    %c0_43 = arith.constant 0 : index
    %c0_44 = arith.constant 0 : index
    %74 = vector.load %arg15[%c0_43, %c0_44] : memref<32x1xf32, #tpu.memory_space<vmem>>, vector<32x1xf32>
    %75 = vector.broadcast %74 : vector<32x1xf32> to vector<32x16xf32>
    %76 = arith.addf %73, %75 : vector<32x16xf32>
    %cst_45 = arith.constant -6.000000e+00 : f32
    %77 = vector.broadcast %cst_45 : f32 to vector<32x16xf32>
    %78 = arith.maximumf %76, %77 : vector<32x16xf32>
    %79 = arith.subf %76, %78 : vector<32x16xf32>
    %80 = math.exp %79 : vector<32x16xf32>
    %cst_46 = arith.constant -6.000000e+00 : f32
    %81 = vector.broadcast %cst_46 : f32 to vector<32x16xf32>
    %82 = arith.subf %81, %78 : vector<32x16xf32>
    %83 = math.exp %82 : vector<32x16xf32>
    %84 = arith.addf %80, %83 : vector<32x16xf32>
    %85 = math.log %84 : vector<32x16xf32>
    %86 = arith.addf %78, %85 : vector<32x16xf32>
    %87 = tpu.iota {dimensions = array<i32: 0>} : vector<32x16xi32>
    %c16_i32 = arith.constant 16 : i32
    %88 = vector.broadcast %c16_i32 : i32 to vector<32x16xi32>
    %89 = arith.cmpi slt, %87, %88 : vector<32x16xi32>
    %90 = arith.select %89, %76, %86 : vector<32x16xi1>, vector<32x16xf32>
    %c16 = arith.constant 16 : index
    %c0_47 = arith.constant 0 : index
    %91 = vector.load %arg17[%c16, %c0_47] : memref<48x16xf32, #tpu.memory_space<vmem>>, vector<32x16xf32>
    tpu.vector_store %arg17[%c16, %c0_47], %90 {strides = array<i32>} : memref<48x16xf32, #tpu.memory_space<vmem>>, vector<32x16xf32>,
    return
  }
  func.func @transform_0(%arg0: i32) -> (i32, i32) {
    %c0_i32 = arith.constant 0 : i32
    %c0_i32_0 = arith.constant 0 : i32
    return %c0_i32, %arg0 : i32, i32
  }
  func.func @transform_1(%arg0: i32) -> (i32, i32) {
    %c0_i32 = arith.constant 0 : i32
    %c0_i32_0 = arith.constant 0 : i32
    return %c0_i32, %arg0 : i32, i32
  }
  func.func @transform_2(%arg0: i32) -> (i32, i32) {
    %c0_i32 = arith.constant 0 : i32
    %c0_i32_0 = arith.constant 0 : i32
    %c0_i32_1 = arith.constant 0 : i32
    return %c0_i32, %c0_i32_0 : i32, i32
  }
  func.func @transform_3(%arg0: i32) -> (i32, i32) {
    %c0_i32 = arith.constant 0 : i32
    %c0_i32_0 = arith.constant 0 : i32
    %c0_i32_1 = arith.constant 0 : i32
    return %c0_i32, %c0_i32_0 : i32, i32
  }
  func.func @transform_4(%arg0: i32) -> (i32, i32) {
    %c0_i32 = arith.constant 0 : i32
    %c0_i32_0 = arith.constant 0 : i32
    %c0_i32_1 = arith.constant 0 : i32
    return %c0_i32, %c0_i32_0 : i32, i32
  }
  func.func @transform_5(%arg0: i32) -> (i32, i32) {
    %c0_i32 = arith.constant 0 : i32
    %c0_i32_0 = arith.constant 0 : i32
    %c0_i32_1 = arith.constant 0 : i32
    return %c0_i32, %c0_i32_0 : i32, i32
  }
  func.func @transform_6(%arg0: i32) -> (i32, i32) {
    %c0_i32 = arith.constant 0 : i32
    %c0_i32_0 = arith.constant 0 : i32
    %c0_i32_1 = arith.constant 0 : i32
    return %c0_i32, %c0_i32_0 : i32, i32
  }
  func.func @transform_7(%arg0: i32) -> (i32, i32) {
    %c0_i32 = arith.constant 0 : i32
    %c0_i32_0 = arith.constant 0 : i32
    %c0_i32_1 = arith.constant 0 : i32
    return %c0_i32, %c0_i32_0 : i32, i32
  }
  func.func @transform_8(%arg0: i32) -> (i32, i32) {
    %c0_i32 = arith.constant 0 : i32
    %c0_i32_0 = arith.constant 0 : i32
    %c0_i32_1 = arith.constant 0 : i32
    return %c0_i32, %c0_i32_0 : i32, i32
  }
  func.func @transform_9(%arg0: i32) -> (i32, i32) {
    %c0_i32 = arith.constant 0 : i32
    %c0_i32_0 = arith.constant 0 : i32
    %c0_i32_1 = arith.constant 0 : i32
    return %c0_i32, %c0_i32_0 : i32, i32
  }
  func.func @transform_10(%arg0: i32) -> (i32, i32) {
    %c0_i32 = arith.constant 0 : i32
    %c0_i32_0 = arith.constant 0 : i32
    %c0_i32_1 = arith.constant 0 : i32
    return %c0_i32, %c0_i32_0 : i32, i32
  }
  func.func @transform_11(%arg0: i32) -> (i32, i32) {
    %c0_i32 = arith.constant 0 : i32
    %c0_i32_0 = arith.constant 0 : i32
    %c0_i32_1 = arith.constant 0 : i32
    return %c0_i32, %c0_i32_0 : i32, i32
  }
  func.func @transform_12(%arg0: i32) -> (i32, i32) {
    %c0_i32 = arith.constant 0 : i32
    %c0_i32_0 = arith.constant 0 : i32
    %c0_i32_1 = arith.constant 0 : i32
    return %c0_i32, %c0_i32_0 : i32, i32
  }
  func.func @transform_13(%arg0: i32) -> (i32, i32) {
    %c0_i32 = arith.constant 0 : i32
    %c0_i32_0 = arith.constant 0 : i32
    %c0_i32_1 = arith.constant 0 : i32
    return %c0_i32, %c0_i32_0 : i32, i32
  }
  func.func @transform_14(%arg0: i32) -> (i32, i32) {
    %c0_i32 = arith.constant 0 : i32
    %c0_i32_0 = arith.constant 0 : i32
    %c0_i32_1 = arith.constant 0 : i32
    return %c0_i32, %c0_i32_0 : i32, i32
  }
  func.func @transform_15(%arg0: i32) -> i32 {
    %c0_i32 = arith.constant 0 : i32
    %c0_i32_0 = arith.constant 0 : i32
    return %c0_i32 : i32
  }
  func.func @transform_16(%arg0: i32) -> (i32, i32) {
    %c0_i32 = arith.constant 0 : i32
    %c0_i32_0 = arith.constant 0 : i32
    return %c0_i32, %arg0 : i32, i32
  }
}

</mosaic_0001>

<llo_original>
// kernel: tpu_custom_call.1
$region0: #{tpu_custom_call.1}
  #allocation0 [shape = 'u32[]', space=smem, size = 0x4, offset = 0x4, fixed_abs, tag = 'smem constant byte address 0x4 - core index']
  #allocation1 [shape = 'u32[144,128]{1,0:T(1,128)}', space=vmem, size = 0x12000, scoped, tag = 'internal scratch']
  #allocation2 [shape = 'f32[1]{0:T(128)S(6)}', space=smem, size = 0x200, scoped, tag = 'scoped memory for tpu_custom_call.1']
  %s0 = inlined_call_operand.vmem [shape: f32[16,16], index: 0, kind: input, shape index: {}]
  %s1 = inlined_call_operand.vmem [shape: f32[8,16], index: 1, kind: input, shape index: {}]
  %s2 = inlined_call_operand.vmem [shape: f32[16,16], index: 2, kind: input, shape index: {}]
  %s3 = inlined_call_operand.vmem [shape: f32[32,16], index: 3, kind: input, shape index: {}]
  %s4 = inlined_call_operand.vmem [shape: f32[32,1], index: 4, kind: input, shape index: {}]
  %s5 = inlined_call_operand.vmem [shape: f32[32,32], index: 5, kind: input, shape index: {}]
  %s6 = inlined_call_operand.vmem [shape: f32[32,1], index: 6, kind: input, shape index: {}]
  %s7 = inlined_call_operand.vmem [shape: f32[16,32], index: 7, kind: input, shape index: {}]
  %s8 = inlined_call_operand.vmem [shape: f32[16,1], index: 8, kind: input, shape index: {}]
  %s9 = inlined_call_operand.vmem [shape: f32[32,8], index: 9, kind: input, shape index: {}]
  %s10 = inlined_call_operand.vmem [shape: f32[32,1], index: 10, kind: input, shape index: {}]
  %s11 = inlined_call_operand.vmem [shape: f32[32,32], index: 11, kind: input, shape index: {}]
  %s12 = inlined_call_operand.vmem [shape: f32[32,1], index: 12, kind: input, shape index: {}]
  %s13 = inlined_call_operand.vmem [shape: f32[32,32], index: 13, kind: input, shape index: {}]
  %s14 = inlined_call_operand.vmem [shape: f32[32,1], index: 14, kind: input, shape index: {}]
  %s15 = inlined_call_operand.<no memory space> [shape: f32[1], index: 15, kind: input, shape index: {}]
  %s16 = inlined_call_operand.vmem [shape: f32[48,16], index: 16, kind: output, shape index: {}]
  %s17 = sld [smem:[#allocation0]]
  $region74: #{tpu_custom_call.1} parent=0
    _
  %s19 = ssub.s32 1, %s17
  %s20 = scalar_select 0, %s19, %s17
  %21 = sst [smem:[#allocation2]] %s15
  // Predicated region
  $region2: #{tpu_custom_call.1} parent=0 // pred_check
    _
  $region3: #{tpu_custom_call.1} parent=0 // pred_check_branch
    %23 = sbr.rel (0) target = $region5
  $region4: #{tpu_custom_call.1} parent=0 // pred_region
    _
  $region5: #{tpu_custom_call.1} parent=0 // pred_fallthru
    _
  // Predicated region
  $region6: #{tpu_custom_call.1} parent=0 // pred_check
    _
  $region7: #{tpu_custom_call.1} parent=0 // pred_check_branch
    %25 = sbr.rel (0) target = $region9
  $region8: #{tpu_custom_call.1} parent=0 // pred_region
    _
  $region9: #{tpu_custom_call.1} parent=0 // pred_fallthru
    _
  // Predicated region
  $region10: #{tpu_custom_call.1} parent=0 // pred_check
    _
  $region11: #{tpu_custom_call.1} parent=0 // pred_check_branch
    %27 = sbr.rel (0) target = $region13
  $region12: #{tpu_custom_call.1} parent=0 // pred_region
    _
  $region13: #{tpu_custom_call.1} parent=0 // pred_fallthru
    _
  // Predicated region
  $region14: #{tpu_custom_call.1} parent=0 // pred_check
    _
  $region15: #{tpu_custom_call.1} parent=0 // pred_check_branch
    %29 = sbr.rel (0) target = $region17
  $region16: #{tpu_custom_call.1} parent=0 // pred_region
    _
  $region17: #{tpu_custom_call.1} parent=0 // pred_fallthru
    _
  // Predicated region
  $region18: #{tpu_custom_call.1} parent=0 // pred_check
    _
  $region19: #{tpu_custom_call.1} parent=0 // pred_check_branch
    %31 = sbr.rel (0) target = $region21
  $region20: #{tpu_custom_call.1} parent=0 // pred_region
    _
  $region21: #{tpu_custom_call.1} parent=0 // pred_fallthru
    _
  // Predicated region
  $region22: #{tpu_custom_call.1} parent=0 // pred_check
    _
  $region23: #{tpu_custom_call.1} parent=0 // pred_check_branch
    %33 = sbr.rel (0) target = $region25
  $region24: #{tpu_custom_call.1} parent=0 // pred_region
    _
  $region25: #{tpu_custom_call.1} parent=0 // pred_fallthru
    _
  // Predicated region
  $region26: #{tpu_custom_call.1} parent=0 // pred_check
    _
  $region27: #{tpu_custom_call.1} parent=0 // pred_check_branch
    %35 = sbr.rel (0) target = $region29
  $region28: #{tpu_custom_call.1} parent=0 // pred_region
    _
  $region29: #{tpu_custom_call.1} parent=0 // pred_fallthru
    _
  // Predicated region
  $region30: #{tpu_custom_call.1} parent=0 // pred_check
    _
  $region31: #{tpu_custom_call.1} parent=0 // pred_check_branch
    %37 = sbr.rel (0) target = $region33
  $region32: #{tpu_custom_call.1} parent=0 // pred_region
    _
  $region33: #{tpu_custom_call.1} parent=0 // pred_fallthru
    _
  // Predicated region
  $region34: #{tpu_custom_call.1} parent=0 // pred_check
    _
  $region35: #{tpu_custom_call.1} parent=0 // pred_check_branch
    %39 = sbr.rel (0) target = $region37
  $region36: #{tpu_custom_call.1} parent=0 // pred_region
    _
  $region37: #{tpu_custom_call.1} parent=0 // pred_fallthru
    _
  // Predicated region
  $region38: #{tpu_custom_call.1} parent=0 // pred_check
    _
  $region39: #{tpu_custom_call.1} parent=0 // pred_check_branch
    %41 = sbr.rel (0) target = $region41
  $region40: #{tpu_custom_call.1} parent=0 // pred_region
    _
  $region41: #{tpu_custom_call.1} parent=0 // pred_fallthru
    _
  // Predicated region
  $region42: #{tpu_custom_call.1} parent=0 // pred_check
    _
  $region43: #{tpu_custom_call.1} parent=0 // pred_check_branch
    %43 = sbr.rel (0) target = $region45
  $region44: #{tpu_custom_call.1} parent=0 // pred_region
    _
  $region45: #{tpu_custom_call.1} parent=0 // pred_fallthru
    _
  // Predicated region
  $region46: #{tpu_custom_call.1} parent=0 // pred_check
    _
  $region47: #{tpu_custom_call.1} parent=0 // pred_check_branch
    %45 = sbr.rel (0) target = $region49
  $region48: #{tpu_custom_call.1} parent=0 // pred_region
    _
  $region49: #{tpu_custom_call.1} parent=0 // pred_fallthru
    _
  // Predicated region
  $region50: #{tpu_custom_call.1} parent=0 // pred_check
    _
  $region51: #{tpu_custom_call.1} parent=0 // pred_check_branch
    %47 = sbr.rel (0) target = $region53
  $region52: #{tpu_custom_call.1} parent=0 // pred_region
    _
  $region53: #{tpu_custom_call.1} parent=0 // pred_fallthru
    _
  // Predicated region
  $region54: #{tpu_custom_call.1} parent=0 // pred_check
    _
  $region55: #{tpu_custom_call.1} parent=0 // pred_check_branch
    %49 = sbr.rel (0) target = $region57
  $region56: #{tpu_custom_call.1} parent=0 // pred_region
    _
  $region57: #{tpu_custom_call.1} parent=0 // pred_fallthru
    _
  // Predicated region
  $region58: #{tpu_custom_call.1} parent=0 // pred_check
    _
  $region59: #{tpu_custom_call.1} parent=0 // pred_check_branch
    %51 = sbr.rel (0) target = $region61
  $region60: #{tpu_custom_call.1} parent=0 // pred_region
    _
  $region61: #{tpu_custom_call.1} parent=0 // pred_fallthru
    _
  // Predicated region
  $region62: #{tpu_custom_call.1} parent=0 // pred_check
    _
  $region63: #{tpu_custom_call.1} parent=0 // pred_check_branch
    %53 = sbr.rel (0) target = $region65
  $region64: #{tpu_custom_call.1} parent=0 // pred_region
    _
  $region65: #{tpu_custom_call.1} parent=0 // pred_fallthru
    _
  %s54 = sld [smem:[#allocation2]]
  %v55 = vld [vmem:[%s2] sm:$0xff]
  %v56 = vld [vmem:[%s2 + $0x8] sm:$0xff]
  %v57 = vld [vmem:[%s0] sm:$0xff]
  %v58 = vld [vmem:[%s0 + $0x8] sm:$0xff]
  %vm59 = vcmask 130048
  %v61 = vsel %vm59, %v55, 0
  %v64 = vsel %vm59, %v56, 0
  %66 = vmatprep.subr.mxu0 0.0
  %67 = vmatpush1.msra.mxu0 %v57
  %68 = vmatprep.subr.mxu0 0.0
  %69 = vmatpush1.msra.mxu0 %v58
  %70 = vmatprep.subr.mxu0 0.0
  %71 = vmatpush1.msra.mxu0 0.0
  %72 = vmatprep.subr.mxu0 0.0
  %73 = vmatpush1.msra.mxu0 0.0
  %74 = vmatprep.subr.mxu0 0.0
  %75 = vmatpush1.msra.mxu0 0.0
  %76 = vmatprep.subr.mxu0 0.0
  %77 = vmatpush1.msra.mxu0 0.0
  %78 = vmatprep.subr.mxu0 0.0
  %79 = vmatpush1.msra.mxu0 0.0
  %80 = vmatprep.subr.mxu0 0.0
  %81 = vmatpush1.msra.mxu0 0.0
  %82 = vmatprep.subr.mxu0 0.0
  %83 = vmatpush1.msra.mxu0 0.0
  %84 = vmatprep.subr.mxu0 0.0
  %85 = vmatpush1.msra.mxu0 0.0
  %86 = vmatprep.subr.mxu0 0.0
  %87 = vmatpush1.msra.mxu0 0.0
  %88 = vmatprep.subr.mxu0 0.0
  %89 = vmatpush1.msra.mxu0 0.0
  %90 = vmatprep.subr.mxu0 0.0
  %91 = vmatpush1.msra.mxu0 0.0
  %92 = vmatprep.subr.mxu0 0.0
  %93 = vmatpush1.msra.mxu0 0.0
  %94 = vmatprep.subr.mxu0 0.0
  %95 = vmatpush1.msra.mxu0 0.0
  %96 = vmatprep.subr.mxu0 0.0
  %97 = vmatpush1.msra.mxu0 0.0
  %98 = vmatprep.subr.mxu0 0.0
  %99 = vmatpush1.msra.mxu0 0.0
  %100 = vmatprep.subr.mxu0 0.0
  %101 = vmatpush1.msra.mxu0 0.0
  %102 = vmatprep.subr.mxu0 0.0
  %103 = vmatpush1.msra.mxu0 0.0
  %104 = vmatprep.subr.mxu0 0.0
  %105 = vmatpush1.msra.mxu0 0.0
  %106 = vmatprep.subr.mxu0 0.0
  %107 = vmatpush1.msra.mxu0 0.0
  %108 = vmatprep.subr.mxu0 0.0
  %109 = vmatpush1.msra.mxu0 0.0
  %110 = vmatprep.subr.mxu0 0.0
  %111 = vmatpush1.msra.mxu0 0.0
  %112 = vmatprep.subr.mxu0 0.0
  %113 = vmatpush1.msra.mxu0 0.0
  %114 = vmatprep.subr.mxu0 0.0
  %115 = vmatpush1.msra.mxu0 0.0
  %116 = vmatprep.subr.mxu0 0.0
  %117 = vmatpush1.msra.mxu0 0.0
  %118 = vmatprep.subr.mxu0 0.0
  %119 = vmatpush1.msra.mxu0 0.0
  %120 = vmatprep.subr.mxu0 0.0
  %121 = vmatpush1.msra.mxu0 0.0
  %122 = vmatprep.subr.mxu0 0.0
  %123 = vmatpush1.msra.mxu0 0.0
  %124 = vmatprep.subr.mxu0 0.0
  %125 = vmatpush1.msra.mxu0 0.0
  %126 = vmatprep.subr.mxu0 0.0
  %127 = vmatpush1.msra.mxu0 0.0
  %128 = vmatprep.subr.mxu0 0.0
  %129 = vmatpush1.msra.mxu0 0.0
  %130 = vmatprep.mubr.f32.mxu0 0.0
  %131 = vmatmul.mubr.f32.gmra.mrb[0].mxu0 %v61
  %v132 = vpop.f32.mrb[0].mxu0
  %v133 = vadd.f32 0.0, %v132
  %v134 = vpop.f32.mrb[0].mxu0
  %135 = vmatprep.mubr.f32.mxu0 0.0
  %136 = vmatmul.mubr.f32.gmra.mrb[0].mxu0 %v64
  %v137 = vpop.f32.mrb[0].mxu0
  %v138 = vadd.f32 0.0, %v137
  %v139 = vpop.f32.mrb[0].mxu0
  %140 = vdwg.mxu0
  %v141 = vld [vmem:[%s3] sm:$0xff]
  %v142 = vld [vmem:[%s3 + $0x8] sm:$0xff]
  %v143 = vld [vmem:[%s3 + $0x10] sm:$0xff]
  %v144 = vld [vmem:[%s3 + $0x18] sm:$0xff]
  %v145 = vld [vmem:[%s4] sm:$0xff]
  %v146 = vld [vmem:[%s4 + $0x8] sm:$0xff]
  %v147 = vld [vmem:[%s4 + $0x10] sm:$0xff]
  %v148 = vld [vmem:[%s4 + $0x18] sm:$0xff]
  %150 = vset.pattern.permute.xlu0 0
  %151 = vperm.xlu0 %150, %v145
  %v152 = vpop.permute.xlu0 %151
  %155 = vset.pattern.permute.xlu0 0
  %156 = vperm.xlu0 %155, %v146
  %v157 = vpop.permute.xlu0 %156
  %160 = vset.pattern.permute.xlu0 0
  %161 = vperm.xlu0 %160, %v147
  %v162 = vpop.permute.xlu0 %161
  %165 = vset.pattern.permute.xlu0 0
  %166 = vperm.xlu0 %165, %v148
  %v167 = vpop.permute.xlu0 %166
  %v170 = vsel %vm59, %v141, 0
  %v173 = vsel %vm59, %v142, 0
  %v176 = vsel %vm59, %v143, 0
  %v179 = vsel %vm59, %v144, 0
  %181 = vmatprep.subr.mxu0 0.0
  %182 = vmatpush1.msra.mxu0 %v133
  %183 = vmatprep.subr.mxu0 0.0
  %184 = vmatpush1.msra.mxu0 %v138
  %185 = vmatprep.subr.mxu0 0.0
  %186 = vmatpush1.msra.mxu0 0.0
  %187 = vmatprep.subr.mxu0 0.0
  %188 = vmatpush1.msra.mxu0 0.0
  %189 = vmatprep.subr.mxu0 0.0
  %190 = vmatpush1.msra.mxu0 0.0
  %191 = vmatprep.subr.mxu0 0.0
  %192 = vmatpush1.msra.mxu0 0.0
  %193 = vmatprep.subr.mxu0 0.0
  %194 = vmatpush1.msra.mxu0 0.0
  %195 = vmatprep.subr.mxu0 0.0
  %196 = vmatpush1.msra.mxu0 0.0
  %197 = vmatprep.subr.mxu0 0.0
  %198 = vmatpush1.msra.mxu0 0.0
  %199 = vmatprep.subr.mxu0 0.0
  %200 = vmatpush1.msra.mxu0 0.0
  %201 = vmatprep.subr.mxu0 0.0
  %202 = vmatpush1.msra.mxu0 0.0
  %203 = vmatprep.subr.mxu0 0.0
  %204 = vmatpush1.msra.mxu0 0.0
  %205 = vmatprep.subr.mxu0 0.0
  %206 = vmatpush1.msra.mxu0 0.0
  %207 = vmatprep.subr.mxu0 0.0
  %208 = vmatpush1.msra.mxu0 0.0
  %209 = vmatprep.subr.mxu0 0.0
  %210 = vmatpush1.msra.mxu0 0.0
  %211 = vmatprep.subr.mxu0 0.0
  %212 = vmatpush1.msra.mxu0 0.0
  %213 = vmatprep.subr.mxu0 0.0
  %214 = vmatpush1.msra.mxu0 0.0
  %215 = vmatprep.subr.mxu0 0.0
  %216 = vmatpush1.msra.mxu0 0.0
  %217 = vmatprep.subr.mxu0 0.0
  %218 = vmatpush1.msra.mxu0 0.0
  %219 = vmatprep.subr.mxu0 0.0
  %220 = vmatpush1.msra.mxu0 0.0
  %221 = vmatprep.subr.mxu0 0.0
  %222 = vmatpush1.msra.mxu0 0.0
  %223 = vmatprep.subr.mxu0 0.0
  %224 = vmatpush1.msra.mxu0 0.0
  %225 = vmatprep.subr.mxu0 0.0
  %226 = vmatpush1.msra.mxu0 0.0
  %227 = vmatprep.subr.mxu0 0.0
  %228 = vmatpush1.msra.mxu0 0.0
  %229 = vmatprep.subr.mxu0 0.0
  %230 = vmatpush1.msra.mxu0 0.0
  %231 = vmatprep.subr.mxu0 0.0
  %232 = vmatpush1.msra.mxu0 0.0
  %233 = vmatprep.subr.mxu0 0.0
  %234 = vmatpush1.msra.mxu0 0.0
  %235 = vmatprep.subr.mxu0 0.0
  %236 = vmatpush1.msra.mxu0 0.0
  %237 = vmatprep.subr.mxu0 0.0
  %238 = vmatpush1.msra.mxu0 0.0
  %239 = vmatprep.subr.mxu0 0.0
  %240 = vmatpush1.msra.mxu0 0.0
  %241 = vmatprep.subr.mxu0 0.0
  %242 = vmatpush1.msra.mxu0 0.0
  %243 = vmatprep.subr.mxu0 0.0
  %244 = vmatpush1.msra.mxu0 0.0
  %245 = vmatprep.mubr.f32.mxu0 0.0
  %246 = vmatmul.mubr.f32.gmra.mrb[0].mxu0 %v170
  %v247 = vpop.f32.mrb[0].mxu0
  %v248 = vadd.f32 %v152, %v247
  %v249 = vpop.f32.mrb[0].mxu0
  %250 = vmatprep.mubr.f32.mxu0 0.0
  %251 = vmatmul.mubr.f32.gmra.mrb[0].mxu0 %v173
  %v252 = vpop.f32.mrb[0].mxu0
  %v253 = vadd.f32 %v157, %v252
  %v254 = vpop.f32.mrb[0].mxu0
  %255 = vmatprep.mubr.f32.mxu0 0.0
  %256 = vmatmul.mubr.f32.gmra.mrb[0].mxu0 %v176
  %v257 = vpop.f32.mrb[0].mxu0
  %v258 = vadd.f32 %v162, %v257
  %v259 = vpop.f32.mrb[0].mxu0
  %260 = vmatprep.mubr.f32.mxu0 0.0
  %261 = vmatmul.mubr.f32.gmra.mrb[0].mxu0 %v179
  %v262 = vpop.f32.mrb[0].mxu0
  %v263 = vadd.f32 %v167, %v262
  %v264 = vpop.f32.mrb[0].mxu0
  %265 = vdwg.mxu0
  %vm266 = vcmp.ge.f32.partialorder %v248, 0.0
  %vm267 = vcmp.ge.f32.partialorder %v253, 0.0
  %vm268 = vcmp.ge.f32.partialorder %v258, 0.0
  %vm269 = vcmp.ge.f32.partialorder %v263, 0.0
  %v270 = vstv %s54
  %v271 = vmul.f32 %v270, %v248
  %v272 = vmul.f32 %v270, %v253
  %v273 = vmul.f32 %v270, %v258
  %v274 = vmul.f32 %v270, %v263
  %v275 = vsel %vm266, %v248, %v271
  %v276 = vsel %vm267, %v253, %v272
  %v277 = vsel %vm268, %v258, %v273
  %v278 = vsel %vm269, %v263, %v274
  %v279 = vld [vmem:[%s5] sm:$0xff]
  %v280 = vld [vmem:[%s5 + $0x8] sm:$0xff]
  %v281 = vld [vmem:[%s5 + $0x10] sm:$0xff]
  %v282 = vld [vmem:[%s5 + $0x18] sm:$0xff]
  %v283 = vld [vmem:[%s6] sm:$0xff]
  %v284 = vld [vmem:[%s6 + $0x8] sm:$0xff]
  %v285 = vld [vmem:[%s6 + $0x10] sm:$0xff]
  %v286 = vld [vmem:[%s6 + $0x18] sm:$0xff]
  %288 = vset.pattern.permute.xlu0 0
  %289 = vperm.xlu0 %288, %v283
  %v290 = vpop.permute.xlu0 %289
  %293 = vset.pattern.permute.xlu0 0
  %294 = vperm.xlu0 %293, %v284
  %v295 = vpop.permute.xlu0 %294
  %298 = vset.pattern.permute.xlu0 0
  %299 = vperm.xlu0 %298, %v285
  %v300 = vpop.permute.xlu0 %299
  %303 = vset.pattern.permute.xlu0 0
  %304 = vperm.xlu0 %303, %v286
  %v305 = vpop.permute.xlu0 %304
  %vm307 = vcmask 261120
  %v309 = vsel %vm307, %v279, 0
  %v312 = vsel %vm307, %v280, 0
  %v315 = vsel %vm307, %v281, 0
  %v318 = vsel %vm307, %v282, 0
  %320 = vmatprep.subr.mxu0 0.0
  %321 = vmatpush1.msra.mxu0 %v275
  %322 = vmatprep.subr.mxu0 0.0
  %323 = vmatpush1.msra.mxu0 %v276
  %324 = vmatprep.subr.mxu0 0.0
  %325 = vmatpush1.msra.mxu0 %v277
  %326 = vmatprep.subr.mxu0 0.0
  %327 = vmatpush1.msra.mxu0 %v278
  %328 = vmatprep.subr.mxu0 0.0
  %329 = vmatpush1.msra.mxu0 0.0
  %330 = vmatprep.subr.mxu0 0.0
  %331 = vmatpush1.msra.mxu0 0.0
  %332 = vmatprep.subr.mxu0 0.0
  %333 = vmatpush1.msra.mxu0 0.0
  %334 = vmatprep.subr.mxu0 0.0
  %335 = vmatpush1.msra.mxu0 0.0
  %336 = vmatprep.subr.mxu0 0.0
  %337 = vmatpush1.msra.mxu0 0.0
  %338 = vmatprep.subr.mxu0 0.0
  %339 = vmatpush1.msra.mxu0 0.0
  %340 = vmatprep.subr.mxu0 0.0
  %341 = vmatpush1.msra.mxu0 0.0
  %342 = vmatprep.subr.mxu0 0.0
  %343 = vmatpush1.msra.mxu0 0.0
  %344 = vmatprep.subr.mxu0 0.0
  %345 = vmatpush1.msra.mxu0 0.0
  %346 = vmatprep.subr.mxu0 0.0
  %347 = vmatpush1.msra.mxu0 0.0
  %348 = vmatprep.subr.mxu0 0.0
  %349 = vmatpush1.msra.mxu0 0.0
  %350 = vmatprep.subr.mxu0 0.0
  %351 = vmatpush1.msra.mxu0 0.0
  %352 = vmatprep.subr.mxu0 0.0
  %353 = vmatpush1.msra.mxu0 0.0
  %354 = vmatprep.subr.mxu0 0.0
  %355 = vmatpush1.msra.mxu0 0.0
  %356 = vmatprep.subr.mxu0 0.0
  %357 = vmatpush1.msra.mxu0 0.0
  %358 = vmatprep.subr.mxu0 0.0
  %359 = vmatpush1.msra.mxu0 0.0
  %360 = vmatprep.subr.mxu0 0.0
  %361 = vmatpush1.msra.mxu0 0.0
  %362 = vmatprep.subr.mxu0 0.0
  %363 = vmatpush1.msra.mxu0 0.0
  %364 = vmatprep.subr.mxu0 0.0
  %365 = vmatpush1.msra.mxu0 0.0
  %366 = vmatprep.subr.mxu0 0.0
  %367 = vmatpush1.msra.mxu0 0.0
  %368 = vmatprep.subr.mxu0 0.0
  %369 = vmatpush1.msra.mxu0 0.0
  %370 = vmatprep.subr.mxu0 0.0
  %371 = vmatpush1.msra.mxu0 0.0
  %372 = vmatprep.subr.mxu0 0.0
  %373 = vmatpush1.msra.mxu0 0.0
  %374 = vmatprep.subr.mxu0 0.0
  %375 = vmatpush1.msra.mxu0 0.0
  %376 = vmatprep.subr.mxu0 0.0
  %377 = vmatpush1.msra.mxu0 0.0
  %378 = vmatprep.subr.mxu0 0.0
  %379 = vmatpush1.msra.mxu0 0.0
  %380 = vmatprep.subr.mxu0 0.0
  %381 = vmatpush1.msra.mxu0 0.0
  %382 = vmatprep.subr.mxu0 0.0
  %383 = vmatpush1.msra.mxu0 0.0
  %384 = vmatprep.mubr.f32.mxu0 0.0
  %385 = vmatmul.mubr.f32.gmra.mrb[0].mxu0 %v309
  %v386 = vpop.f32.mrb[0].mxu0
  %v387 = vadd.f32 %v290, %v386
  %v388 = vpop.f32.mrb[0].mxu0
  %389 = vmatprep.mubr.f32.mxu0 0.0
  %390 = vmatmul.mubr.f32.gmra.mrb[0].mxu0 %v312
  %v391 = vpop.f32.mrb[0].mxu0
  %v392 = vadd.f32 %v295, %v391
  %v393 = vpop.f32.mrb[0].mxu0
  %394 = vmatprep.mubr.f32.mxu0 0.0
  %395 = vmatmul.mubr.f32.gmra.mrb[0].mxu0 %v315
  %v396 = vpop.f32.mrb[0].mxu0
  %v397 = vadd.f32 %v300, %v396
  %v398 = vpop.f32.mrb[0].mxu0
  %399 = vmatprep.mubr.f32.mxu0 0.0
  %400 = vmatmul.mubr.f32.gmra.mrb[0].mxu0 %v318
  %v401 = vpop.f32.mrb[0].mxu0
  %v402 = vadd.f32 %v305, %v401
  %v403 = vpop.f32.mrb[0].mxu0
  %404 = vdwg.mxu0
  %vm405 = vcmp.ge.f32.partialorder %v387, 0.0
  %vm406 = vcmp.ge.f32.partialorder %v392, 0.0
  %vm407 = vcmp.ge.f32.partialorder %v397, 0.0
  %vm408 = vcmp.ge.f32.partialorder %v402, 0.0
  %v409 = vmul.f32 %v270, %v387
  %v410 = vmul.f32 %v270, %v392
  %v411 = vmul.f32 %v270, %v397
  %v412 = vmul.f32 %v270, %v402
  %v413 = vsel %vm405, %v387, %v409
  %v414 = vsel %vm406, %v392, %v410
  %v415 = vsel %vm407, %v397, %v411
  %v416 = vsel %vm408, %v402, %v412
  %v417 = vld [vmem:[%s7] sm:$0xff]
  %v418 = vld [vmem:[%s7 + $0x8] sm:$0xff]
  %v419 = vld [vmem:[%s8] sm:$0xff]
  %v420 = vld [vmem:[%s8 + $0x8] sm:$0xff]
  %422 = vset.pattern.permute.xlu0 0
  %423 = vperm.xlu0 %422, %v419
  %v424 = vpop.permute.xlu0 %423
  %427 = vset.pattern.permute.xlu0 0
  %428 = vperm.xlu0 %427, %v420
  %v429 = vpop.permute.xlu0 %428
  %v432 = vsel %vm307, %v417, 0
  %v435 = vsel %vm307, %v418, 0
  %437 = vmatprep.subr.mxu0 0.0
  %438 = vmatpush1.msra.mxu0 %v413
  %439 = vmatprep.subr.mxu0 0.0
  %440 = vmatpush1.msra.mxu0 %v414
  %441 = vmatprep.subr.mxu0 0.0
  %442 = vmatpush1.msra.mxu0 %v415
  %443 = vmatprep.subr.mxu0 0.0
  %444 = vmatpush1.msra.mxu0 %v416
  %445 = vmatprep.subr.mxu0 0.0
  %446 = vmatpush1.msra.mxu0 0.0
  %447 = vmatprep.subr.mxu0 0.0
  %448 = vmatpush1.msra.mxu0 0.0
  %449 = vmatprep.subr.mxu0 0.0
  %450 = vmatpush1.msra.mxu0 0.0
  %451 = vmatprep.subr.mxu0 0.0
  %452 = vmatpush1.msra.mxu0 0.0
  %453 = vmatprep.subr.mxu0 0.0
  %454 = vmatpush1.msra.mxu0 0.0
  %455 = vmatprep.subr.mxu0 0.0
  %456 = vmatpush1.msra.mxu0 0.0
  %457 = vmatprep.subr.mxu0 0.0
  %458 = vmatpush1.msra.mxu0 0.0
  %459 = vmatprep.subr.mxu0 0.0
  %460 = vmatpush1.msra.mxu0 0.0
  %461 = vmatprep.subr.mxu0 0.0
  %462 = vmatpush1.msra.mxu0 0.0
  %463 = vmatprep.subr.mxu0 0.0
  %464 = vmatpush1.msra.mxu0 0.0
  %465 = vmatprep.subr.mxu0 0.0
  %466 = vmatpush1.msra.mxu0 0.0
  %467 = vmatprep.subr.mxu0 0.0
  %468 = vmatpush1.msra.mxu0 0.0
  %469 = vmatprep.subr.mxu0 0.0
  %470 = vmatpush1.msra.mxu0 0.0
  %471 = vmatprep.subr.mxu0 0.0
  %472 = vmatpush1.msra.mxu0 0.0
  %473 = vmatprep.subr.mxu0 0.0
  %474 = vmatpush1.msra.mxu0 0.0
  %475 = vmatprep.subr.mxu0 0.0
  %476 = vmatpush1.msra.mxu0 0.0
  %477 = vmatprep.subr.mxu0 0.0
  %478 = vmatpush1.msra.mxu0 0.0
  %479 = vmatprep.subr.mxu0 0.0
  %480 = vmatpush1.msra.mxu0 0.0
  %481 = vmatprep.subr.mxu0 0.0
  %482 = vmatpush1.msra.mxu0 0.0
  %483 = vmatprep.subr.mxu0 0.0
  %484 = vmatpush1.msra.mxu0 0.0
  %485 = vmatprep.subr.mxu0 0.0
  %486 = vmatpush1.msra.mxu0 0.0
  %487 = vmatprep.subr.mxu0 0.0
  %488 = vmatpush1.msra.mxu0 0.0
  %489 = vmatprep.subr.mxu0 0.0
  %490 = vmatpush1.msra.mxu0 0.0
  %491 = vmatprep.subr.mxu0 0.0
  %492 = vmatpush1.msra.mxu0 0.0
  %493 = vmatprep.subr.mxu0 0.0
  %494 = vmatpush1.msra.mxu0 0.0
  %495 = vmatprep.subr.mxu0 0.0
  %496 = vmatpush1.msra.mxu0 0.0
  %497 = vmatprep.subr.mxu0 0.0
  %498 = vmatpush1.msra.mxu0 0.0
  %499 = vmatprep.subr.mxu0 0.0
  %500 = vmatpush1.msra.mxu0 0.0
  %501 = vmatprep.mubr.f32.mxu0 0.0
  %502 = vmatmul.mubr.f32.gmra.mrb[0].mxu0 %v432
  %v503 = vpop.f32.mrb[0].mxu0
  %v504 = vadd.f32 %v424, %v503
  %v505 = vpop.f32.mrb[0].mxu0
  %506 = vmatprep.mubr.f32.mxu0 0.0
  %507 = vmatmul.mubr.f32.gmra.mrb[0].mxu0 %v435
  %v508 = vpop.f32.mrb[0].mxu0
  %v509 = vadd.f32 %v429, %v508
  %v510 = vpop.f32.mrb[0].mxu0
  %511 = vdwg.mxu0
  %v512 = vmax.f32 %v504, -6.0
  %v513 = vmax.f32 %v509, -6.0
  %v514 = vsub.f32 %v504, %v512
  %v515 = vsub.f32 %v509, %v513
  %v516 = vmul.f32 %v514, 1.442695
  %v517 = vpow.pop %v516
  %v518 = vmul.f32 %v515, 1.442695
  %v519 = vpow.pop %v518
  %v520 = vsub.f32 -6.0, %v512
  %v521 = vsub.f32 -6.0, %v513
  %v522 = vmul.f32 %v520, 1.442695
  %v523 = vpow.pop %v522
  %v524 = vmul.f32 %v521, 1.442695
  %v525 = vpow.pop %v524
  %v526 = vadd.f32 %v517, %v523
  %v527 = vadd.f32 %v519, %v525
  %v528 = vlog2.pop %v526
  %v529 = vmul.f32 %v528, 0.6931472
  %v530 = vlog2.pop %v527
  %v531 = vmul.f32 %v530, 0.6931472
  %v532 = vadd.f32 %v512, %v529
  %v533 = vadd.f32 %v513, %v531
  %v534 = vlaneseq
  %v535 = vshrl.u32 %v534, 7
  %v536 = vadd.s32 %v535, 8
  %vm537 = vcmp.lt.s32.totalorder %v535, 8
  %vm538 = vcmp.lt.s32.totalorder %v536, 8
  %v539 = vsel %vm537, %v504, %v532
  %v540 = vsel %vm538, %v509, %v533
  %541 = vst.msk [vmem:[%s16] sm:$0xff] %vm59, %v539
  %542 = vst.msk [vmem:[%s16 + $0x8] sm:$0xff] %vm59, %v540
  %v543 = vld [vmem:[%s1] sm:$0xff]
  %v544 = vmul.f32 %v540, 0.5
  %v545 = vmul.f32 %v544, 1.442695
  %v546 = vpow.pop %v545
  %v547 = vmul.f32 %v543, %v546
  %v548 = vadd.f32 %v539, %v547
  %v549 = vld [vmem:[%s9] sm:$0xff]
  %v550 = vld [vmem:[%s9 + $0x8] sm:$0xff]
  %v551 = vld [vmem:[%s9 + $0x10] sm:$0xff]
  %v552 = vld [vmem:[%s9 + $0x18] sm:$0xff]
  %v553 = vld [vmem:[%s10] sm:$0xff]
  %v554 = vld [vmem:[%s10 + $0x8] sm:$0xff]
  %v555 = vld [vmem:[%s10 + $0x10] sm:$0xff]
  %v556 = vld [vmem:[%s10 + $0x18] sm:$0xff]
  %558 = vset.pattern.permute.xlu0 0
  %559 = vperm.xlu0 %558, %v553
  %v560 = vpop.permute.xlu0 %559
  %563 = vset.pattern.permute.xlu0 0
  %564 = vperm.xlu0 %563, %v554
  %v565 = vpop.permute.xlu0 %564
  %568 = vset.pattern.permute.xlu0 0
  %569 = vperm.xlu0 %568, %v555
  %v570 = vpop.permute.xlu0 %569
  %573 = vset.pattern.permute.xlu0 0
  %574 = vperm.xlu0 %573, %v556
  %v575 = vpop.permute.xlu0 %574
  %vm577 = vcmask 64512
  %v579 = vsel %vm577, %v549, 0
  %v582 = vsel %vm577, %v550, 0
  %v585 = vsel %vm577, %v551, 0
  %v588 = vsel %vm577, %v552, 0
  %590 = vmatprep.subr.mxu0 0.0
  %591 = vmatpush1.msra.mxu0 %v548
  %592 = vmatprep.subr.mxu0 0.0
  %593 = vmatpush1.msra.mxu0 0.0
  %594 = vmatprep.subr.mxu0 0.0
  %595 = vmatpush1.msra.mxu0 0.0
  %596 = vmatprep.subr.mxu0 0.0
  %597 = vmatpush1.msra.mxu0 0.0
  %598 = vmatprep.subr.mxu0 0.0
  %599 = vmatpush1.msra.mxu0 0.0
  %600 = vmatprep.subr.mxu0 0.0
  %601 = vmatpush1.msra.mxu0 0.0
  %602 = vmatprep.subr.mxu0 0.0
  %603 = vmatpush1.msra.mxu0 0.0
  %604 = vmatprep.subr.mxu0 0.0
  %605 = vmatpush1.msra.mxu0 0.0
  %606 = vmatprep.subr.mxu0 0.0
  %607 = vmatpush1.msra.mxu0 0.0
  %608 = vmatprep.subr.mxu0 0.0
  %609 = vmatpush1.msra.mxu0 0.0
  %610 = vmatprep.subr.mxu0 0.0
  %611 = vmatpush1.msra.mxu0 0.0
  %612 = vmatprep.subr.mxu0 0.0
  %613 = vmatpush1.msra.mxu0 0.0
  %614 = vmatprep.subr.mxu0 0.0
  %615 = vmatpush1.msra.mxu0 0.0
  %616 = vmatprep.subr.mxu0 0.0
  %617 = vmatpush1.msra.mxu0 0.0
  %618 = vmatprep.subr.mxu0 0.0
  %619 = vmatpush1.msra.mxu0 0.0
  %620 = vmatprep.subr.mxu0 0.0
  %621 = vmatpush1.msra.mxu0 0.0
  %622 = vmatprep.subr.mxu0 0.0
  %623 = vmatpush1.msra.mxu0 0.0
  %624 = vmatprep.subr.mxu0 0.0
  %625 = vmatpush1.msra.mxu0 0.0
  %626 = vmatprep.subr.mxu0 0.0
  %627 = vmatpush1.msra.mxu0 0.0
  %628 = vmatprep.subr.mxu0 0.0
  %629 = vmatpush1.msra.mxu0 0.0
  %630 = vmatprep.subr.mxu0 0.0
  %631 = vmatpush1.msra.mxu0 0.0
  %632 = vmatprep.subr.mxu0 0.0
  %633 = vmatpush1.msra.mxu0 0.0
  %634 = vmatprep.subr.mxu0 0.0
  %635 = vmatpush1.msra.mxu0 0.0
  %636 = vmatprep.subr.mxu0 0.0
  %637 = vmatpush1.msra.mxu0 0.0
  %638 = vmatprep.subr.mxu0 0.0
  %639 = vmatpush1.msra.mxu0 0.0
  %640 = vmatprep.subr.mxu0 0.0
  %641 = vmatpush1.msra.mxu0 0.0
  %642 = vmatprep.subr.mxu0 0.0
  %643 = vmatpush1.msra.mxu0 0.0
  %644 = vmatprep.subr.mxu0 0.0
  %645 = vmatpush1.msra.mxu0 0.0
  %646 = vmatprep.subr.mxu0 0.0
  %647 = vmatpush1.msra.mxu0 0.0
  %648 = vmatprep.subr.mxu0 0.0
  %649 = vmatpush1.msra.mxu0 0.0
  %650 = vmatprep.subr.mxu0 0.0
  %651 = vmatpush1.msra.mxu0 0.0
  %652 = vmatprep.subr.mxu0 0.0
  %653 = vmatpush1.msra.mxu0 0.0
  %654 = vmatprep.mubr.f32.mxu0 0.0
  %655 = vmatmul.mubr.f32.gmra.mrb[0].mxu0 %v579
  %v656 = vpop.f32.mrb[0].mxu0
  %v657 = vadd.f32 %v560, %v656
  %v658 = vpop.f32.mrb[0].mxu0
  %659 = vmatprep.mubr.f32.mxu0 0.0
  %660 = vmatmul.mubr.f32.gmra.mrb[0].mxu0 %v582
  %v661 = vpop.f32.mrb[0].mxu0
  %v662 = vadd.f32 %v565, %v661
  %v663 = vpop.f32.mrb[0].mxu0
  %664 = vmatprep.mubr.f32.mxu0 0.0
  %665 = vmatmul.mubr.f32.gmra.mrb[0].mxu0 %v585
  %v666 = vpop.f32.mrb[0].mxu0
  %v667 = vadd.f32 %v570, %v666
  %v668 = vpop.f32.mrb[0].mxu0
  %669 = vmatprep.mubr.f32.mxu0 0.0
  %670 = vmatmul.mubr.f32.gmra.mrb[0].mxu0 %v588
  %v671 = vpop.f32.mrb[0].mxu0
  %v672 = vadd.f32 %v575, %v671
  %v673 = vpop.f32.mrb[0].mxu0
  %674 = vdwg.mxu0
  %vm675 = vcmp.ge.f32.partialorder %v657, 0.0
  %vm676 = vcmp.ge.f32.partialorder %v662, 0.0
  %vm677 = vcmp.ge.f32.partialorder %v667, 0.0
  %vm678 = vcmp.ge.f32.partialorder %v672, 0.0
  %v679 = vmul.f32 %v270, %v657
  %v680 = vmul.f32 %v270, %v662
  %v681 = vmul.f32 %v270, %v667
  %v682 = vmul.f32 %v270, %v672
  %v683 = vsel %vm675, %v657, %v679
  %v684 = vsel %vm676, %v662, %v680
  %v685 = vsel %vm677, %v667, %v681
  %v686 = vsel %vm678, %v672, %v682
  %v687 = vld [vmem:[%s11] sm:$0xff]
  %v688 = vld [vmem:[%s11 + $0x8] sm:$0xff]
  %v689 = vld [vmem:[%s11 + $0x10] sm:$0xff]
  %v690 = vld [vmem:[%s11 + $0x18] sm:$0xff]
  %v691 = vld [vmem:[%s12] sm:$0xff]
  %v692 = vld [vmem:[%s12 + $0x8] sm:$0xff]
  %v693 = vld [vmem:[%s12 + $0x10] sm:$0xff]
  %v694 = vld [vmem:[%s12 + $0x18] sm:$0xff]
  %696 = vset.pattern.permute.xlu0 0
  %697 = vperm.xlu0 %696, %v691
  %v698 = vpop.permute.xlu0 %697
  %701 = vset.pattern.permute.xlu0 0
  %702 = vperm.xlu0 %701, %v692
  %v703 = vpop.permute.xlu0 %702
  %706 = vset.pattern.permute.xlu0 0
  %707 = vperm.xlu0 %706, %v693
  %v708 = vpop.permute.xlu0 %707
  %711 = vset.pattern.permute.xlu0 0
  %712 = vperm.xlu0 %711, %v694
  %v713 = vpop.permute.xlu0 %712
  %v716 = vsel %vm307, %v687, 0
  %v719 = vsel %vm307, %v688, 0
  %v722 = vsel %vm307, %v689, 0
  %v725 = vsel %vm307, %v690, 0
  %727 = vmatprep.subr.mxu0 0.0
  %728 = vmatpush1.msra.mxu0 %v683
  %729 = vmatprep.subr.mxu0 0.0
  %730 = vmatpush1.msra.mxu0 %v684
  %731 = vmatprep.subr.mxu0 0.0
  %732 = vmatpush1.msra.mxu0 %v685
  %733 = vmatprep.subr.mxu0 0.0
  %734 = vmatpush1.msra.mxu0 %v686
  %735 = vmatprep.subr.mxu0 0.0
  %736 = vmatpush1.msra.mxu0 0.0
  %737 = vmatprep.subr.mxu0 0.0
  %738 = vmatpush1.msra.mxu0 0.0
  %739 = vmatprep.subr.mxu0 0.0
  %740 = vmatpush1.msra.mxu0 0.0
  %741 = vmatprep.subr.mxu0 0.0
  %742 = vmatpush1.msra.mxu0 0.0
  %743 = vmatprep.subr.mxu0 0.0
  %744 = vmatpush1.msra.mxu0 0.0
  %745 = vmatprep.subr.mxu0 0.0
  %746 = vmatpush1.msra.mxu0 0.0
  %747 = vmatprep.subr.mxu0 0.0
  %748 = vmatpush1.msra.mxu0 0.0
  %749 = vmatprep.subr.mxu0 0.0
  %750 = vmatpush1.msra.mxu0 0.0
  %751 = vmatprep.subr.mxu0 0.0
  %752 = vmatpush1.msra.mxu0 0.0
  %753 = vmatprep.subr.mxu0 0.0
  %754 = vmatpush1.msra.mxu0 0.0
  %755 = vmatprep.subr.mxu0 0.0
  %756 = vmatpush1.msra.mxu0 0.0
  %757 = vmatprep.subr.mxu0 0.0
  %758 = vmatpush1.msra.mxu0 0.0
  %759 = vmatprep.subr.mxu0 0.0
  %760 = vmatpush1.msra.mxu0 0.0
  %761 = vmatprep.subr.mxu0 0.0
  %762 = vmatpush1.msra.mxu0 0.0
  %763 = vmatprep.subr.mxu0 0.0
  %764 = vmatpush1.msra.mxu0 0.0
  %765 = vmatprep.subr.mxu0 0.0
  %766 = vmatpush1.msra.mxu0 0.0
  %767 = vmatprep.subr.mxu0 0.0
  %768 = vmatpush1.msra.mxu0 0.0
  %769 = vmatprep.subr.mxu0 0.0
  %770 = vmatpush1.msra.mxu0 0.0
  %771 = vmatprep.subr.mxu0 0.0
  %772 = vmatpush1.msra.mxu0 0.0
  %773 = vmatprep.subr.mxu0 0.0
  %774 = vmatpush1.msra.mxu0 0.0
  %775 = vmatprep.subr.mxu0 0.0
  %776 = vmatpush1.msra.mxu0 0.0
  %777 = vmatprep.subr.mxu0 0.0
  %778 = vmatpush1.msra.mxu0 0.0
  %779 = vmatprep.subr.mxu0 0.0
  %780 = vmatpush1.msra.mxu0 0.0
  %781 = vmatprep.subr.mxu0 0.0
  %782 = vmatpush1.msra.mxu0 0.0
  %783 = vmatprep.subr.mxu0 0.0
  %784 = vmatpush1.msra.mxu0 0.0
  %785 = vmatprep.subr.mxu0 0.0
  %786 = vmatpush1.msra.mxu0 0.0
  %787 = vmatprep.subr.mxu0 0.0
  %788 = vmatpush1.msra.mxu0 0.0
  %789 = vmatprep.subr.mxu0 0.0
  %790 = vmatpush1.msra.mxu0 0.0
  %791 = vmatprep.mubr.f32.mxu0 0.0
  %792 = vmatmul.mubr.f32.gmra.mrb[0].mxu0 %v716
  %v793 = vpop.f32.mrb[0].mxu0
  %v794 = vadd.f32 %v698, %v793
  %v795 = vpop.f32.mrb[0].mxu0
  %796 = vmatprep.mubr.f32.mxu0 0.0
  %797 = vmatmul.mubr.f32.gmra.mrb[0].mxu0 %v719
  %v798 = vpop.f32.mrb[0].mxu0
  %v799 = vadd.f32 %v703, %v798
  %v800 = vpop.f32.mrb[0].mxu0
  %801 = vmatprep.mubr.f32.mxu0 0.0
  %802 = vmatmul.mubr.f32.gmra.mrb[0].mxu0 %v722
  %v803 = vpop.f32.mrb[0].mxu0
  %v804 = vadd.f32 %v708, %v803
  %v805 = vpop.f32.mrb[0].mxu0
  %806 = vmatprep.mubr.f32.mxu0 0.0
  %807 = vmatmul.mubr.f32.gmra.mrb[0].mxu0 %v725
  %v808 = vpop.f32.mrb[0].mxu0
  %v809 = vadd.f32 %v713, %v808
  %v810 = vpop.f32.mrb[0].mxu0
  %811 = vdwg.mxu0
  %vm812 = vcmp.ge.f32.partialorder %v794, 0.0
  %vm813 = vcmp.ge.f32.partialorder %v799, 0.0
  %vm814 = vcmp.ge.f32.partialorder %v804, 0.0
  %vm815 = vcmp.ge.f32.partialorder %v809, 0.0
  %v816 = vmul.f32 %v270, %v794
  %v817 = vmul.f32 %v270, %v799
  %v818 = vmul.f32 %v270, %v804
  %v819 = vmul.f32 %v270, %v809
  %v820 = vsel %vm812, %v794, %v816
  %v821 = vsel %vm813, %v799, %v817
  %v822 = vsel %vm814, %v804, %v818
  %v823 = vsel %vm815, %v809, %v819
  %v824 = vld [vmem:[%s13] sm:$0xff]
  %v825 = vld [vmem:[%s13 + $0x8] sm:$0xff]
  %v826 = vld [vmem:[%s13 + $0x10] sm:$0xff]
  %v827 = vld [vmem:[%s13 + $0x18] sm:$0xff]
  %v828 = vld [vmem:[%s14] sm:$0xff]
  %v829 = vld [vmem:[%s14 + $0x8] sm:$0xff]
  %v830 = vld [vmem:[%s14 + $0x10] sm:$0xff]
  %v831 = vld [vmem:[%s14 + $0x18] sm:$0xff]
  %833 = vset.pattern.permute.xlu0 0
  %834 = vperm.xlu0 %833, %v828
  %v835 = vpop.permute.xlu0 %834
  %838 = vset.pattern.permute.xlu0 0
  %839 = vperm.xlu0 %838, %v829
  %v840 = vpop.permute.xlu0 %839
  %843 = vset.pattern.permute.xlu0 0
  %844 = vperm.xlu0 %843, %v830
  %v845 = vpop.permute.xlu0 %844
  %848 = vset.pattern.permute.xlu0 0
  %849 = vperm.xlu0 %848, %v831
  %v850 = vpop.permute.xlu0 %849
  %v853 = vsel %vm307, %v824, 0
  %v856 = vsel %vm307, %v825, 0
  %v859 = vsel %vm307, %v826, 0
  %v862 = vsel %vm307, %v827, 0
  %864 = vmatprep.subr.mxu0 0.0
  %865 = vmatpush1.msra.mxu0 %v820
  %866 = vmatprep.subr.mxu0 0.0
  %867 = vmatpush1.msra.mxu0 %v821
  %868 = vmatprep.subr.mxu0 0.0
  %869 = vmatpush1.msra.mxu0 %v822
  %870 = vmatprep.subr.mxu0 0.0
  %871 = vmatpush1.msra.mxu0 %v823
  %872 = vmatprep.subr.mxu0 0.0
  %873 = vmatpush1.msra.mxu0 0.0
  %874 = vmatprep.subr.mxu0 0.0
  %875 = vmatpush1.msra.mxu0 0.0
  %876 = vmatprep.subr.mxu0 0.0
  %877 = vmatpush1.msra.mxu0 0.0
  %878 = vmatprep.subr.mxu0 0.0
  %879 = vmatpush1.msra.mxu0 0.0
  %880 = vmatprep.subr.mxu0 0.0
  %881 = vmatpush1.msra.mxu0 0.0
  %882 = vmatprep.subr.mxu0 0.0
  %883 = vmatpush1.msra.mxu0 0.0
  %884 = vmatprep.subr.mxu0 0.0
  %885 = vmatpush1.msra.mxu0 0.0
  %886 = vmatprep.subr.mxu0 0.0
  %887 = vmatpush1.msra.mxu0 0.0
  %888 = vmatprep.subr.mxu0 0.0
  %889 = vmatpush1.msra.mxu0 0.0
  %890 = vmatprep.subr.mxu0 0.0
  %891 = vmatpush1.msra.mxu0 0.0
  %892 = vmatprep.subr.mxu0 0.0
  %893 = vmatpush1.msra.mxu0 0.0
  %894 = vmatprep.subr.mxu0 0.0
  %895 = vmatpush1.msra.mxu0 0.0
  %896 = vmatprep.subr.mxu0 0.0
  %897 = vmatpush1.msra.mxu0 0.0
  %898 = vmatprep.subr.mxu0 0.0
  %899 = vmatpush1.msra.mxu0 0.0
  %900 = vmatprep.subr.mxu0 0.0
  %901 = vmatpush1.msra.mxu0 0.0
  %902 = vmatprep.subr.mxu0 0.0
  %903 = vmatpush1.msra.mxu0 0.0
  %904 = vmatprep.subr.mxu0 0.0
  %905 = vmatpush1.msra.mxu0 0.0
  %906 = vmatprep.subr.mxu0 0.0
  %907 = vmatpush1.msra.mxu0 0.0
  %908 = vmatprep.subr.mxu0 0.0
  %909 = vmatpush1.msra.mxu0 0.0
  %910 = vmatprep.subr.mxu0 0.0
  %911 = vmatpush1.msra.mxu0 0.0
  %912 = vmatprep.subr.mxu0 0.0
  %913 = vmatpush1.msra.mxu0 0.0
  %914 = vmatprep.subr.mxu0 0.0
  %915 = vmatpush1.msra.mxu0 0.0
  %916 = vmatprep.subr.mxu0 0.0
  %917 = vmatpush1.msra.mxu0 0.0
  %918 = vmatprep.subr.mxu0 0.0
  %919 = vmatpush1.msra.mxu0 0.0
  %920 = vmatprep.subr.mxu0 0.0
  %921 = vmatpush1.msra.mxu0 0.0
  %922 = vmatprep.subr.mxu0 0.0
  %923 = vmatpush1.msra.mxu0 0.0
  %924 = vmatprep.subr.mxu0 0.0
  %925 = vmatpush1.msra.mxu0 0.0
  %926 = vmatprep.subr.mxu0 0.0
  %927 = vmatpush1.msra.mxu0 0.0
  %928 = vmatprep.mubr.f32.mxu0 0.0
  %929 = vmatmul.mubr.f32.gmra.mrb[0].mxu0 %v853
  %v930 = vpop.f32.mrb[0].mxu0
  %v931 = vadd.f32 %v835, %v930
  %v932 = vpop.f32.mrb[0].mxu0
  %933 = vmatprep.mubr.f32.mxu0 0.0
  %934 = vmatmul.mubr.f32.gmra.mrb[0].mxu0 %v856
  %v935 = vpop.f32.mrb[0].mxu0
  %v936 = vadd.f32 %v840, %v935
  %v937 = vpop.f32.mrb[0].mxu0
  %938 = vmatprep.mubr.f32.mxu0 0.0
  %939 = vmatmul.mubr.f32.gmra.mrb[0].mxu0 %v859
  %v940 = vpop.f32.mrb[0].mxu0
  %v941 = vadd.f32 %v845, %v940
  %v942 = vpop.f32.mrb[0].mxu0
  %943 = vmatprep.mubr.f32.mxu0 0.0
  %944 = vmatmul.mubr.f32.gmra.mrb[0].mxu0 %v862
  %v945 = vpop.f32.mrb[0].mxu0
  %v946 = vadd.f32 %v850, %v945
  %v947 = vpop.f32.mrb[0].mxu0
  %948 = vdwg.mxu0
  %v949 = vmax.f32 %v931, -6.0
  %v950 = vmax.f32 %v936, -6.0
  %v951 = vmax.f32 %v941, -6.0
  %v952 = vmax.f32 %v946, -6.0
  %v953 = vsub.f32 %v931, %v949
  %v954 = vsub.f32 %v936, %v950
  %v955 = vsub.f32 %v941, %v951
  %v956 = vsub.f32 %v946, %v952
  %v957 = vmul.f32 %v953, 1.442695
  %v958 = vpow.pop %v957
  %v959 = vmul.f32 %v954, 1.442695
  %v960 = vpow.pop %v959
  %v961 = vmul.f32 %v955, 1.442695
  %v962 = vpow.pop %v961
  %v963 = vmul.f32 %v956, 1.442695
  %v964 = vpow.pop %v963
  %v965 = vsub.f32 -6.0, %v949
  %v966 = vsub.f32 -6.0, %v950
  %v967 = vsub.f32 -6.0, %v951
  %v968 = vsub.f32 -6.0, %v952
  %v969 = vmul.f32 %v965, 1.442695
  %v970 = vpow.pop %v969
  %v971 = vmul.f32 %v966, 1.442695
  %v972 = vpow.pop %v971
  %v973 = vmul.f32 %v967, 1.442695
  %v974 = vpow.pop %v973
  %v975 = vmul.f32 %v968, 1.442695
  %v976 = vpow.pop %v975
  %v977 = vadd.f32 %v958, %v970
  %v978 = vadd.f32 %v960, %v972
  %v979 = vadd.f32 %v962, %v974
  %v980 = vadd.f32 %v964, %v976
  %v981 = vlog2.pop %v977
  %v982 = vmul.f32 %v981, 0.6931472
  %v983 = vlog2.pop %v978
  %v984 = vmul.f32 %v983, 0.6931472
  %v985 = vlog2.pop %v979
  %v986 = vmul.f32 %v985, 0.6931472
  %v987 = vlog2.pop %v980
  %v988 = vmul.f32 %v987, 0.6931472
  %v989 = vadd.f32 %v949, %v982
  %v990 = vadd.f32 %v950, %v984
  %v991 = vadd.f32 %v951, %v986
  %v992 = vadd.f32 %v952, %v988
  %v993 = vadd.s32 %v535, 16
  %v994 = vadd.s32 %v535, 24
  %vm995 = vcmp.lt.s32.totalorder %v535, 16
  %vm996 = vcmp.lt.s32.totalorder %v536, 16
  %vm997 = vcmp.lt.s32.totalorder %v993, 16
  %vm998 = vcmp.lt.s32.totalorder %v994, 16
  %v999 = vsel %vm995, %v931, %v989
  %v1000 = vsel %vm996, %v936, %v990
  %v1001 = vsel %vm997, %v941, %v991
  %v1002 = vsel %vm998, %v946, %v992
  %1003 = vst.msk [vmem:[%s16 + $0x10] sm:$0xff] %vm59, %v999
  %1004 = vst.msk [vmem:[%s16 + $0x18] sm:$0xff] %vm59, %v1000
  %1005 = vst.msk [vmem:[%s16 + $0x20] sm:$0xff] %vm59, %v1001
  %1006 = vst.msk [vmem:[%s16 + $0x28] sm:$0xff] %vm59, %v1002
  // Predicated region
  $region66: #{tpu_custom_call.1} parent=0 // pred_check
    _
  $region67: #{tpu_custom_call.1} parent=0 // pred_check_branch
    %1008 = sbr.rel (0) target = $region69
  $region68: #{tpu_custom_call.1} parent=0 // pred_region
    _
  $region69: #{tpu_custom_call.1} parent=0 // pred_fallthru
    _
  // Predicated region
  $region70: #{tpu_custom_call.1} parent=0 // pred_check
    _
  $region71: #{tpu_custom_call.1} parent=0 // pred_check_branch
    %1010 = sbr.rel (0) target = $region73
  $region72: #{tpu_custom_call.1} parent=0 // pred_region
    _
  $region73: #{tpu_custom_call.1} parent=0 // pred_fallthru
    _

</llo_original>
